<compile_context>
chip_gen: v6e
topology: v6e:2x2x1
jax: 0.10.0
libtpu: 0.0.40
codegen_flags: <defaults>
</compile_context>

<pallas_src>
import functools

import jax
import jax.numpy as jnp
from jax.experimental import pallas as pl
from jax.experimental.pallas import tpu as pltpu


def _round_up(x, m):
    return (x + m - 1) // m * m


def link_predictor_kernel(
    z_src_ref, z_dst_ref, t_ref,          # per-row inputs   (TM,C)bf16 (TM,C)bf16 (TM,1)f32
    tw_ref, tb_ref,                       # time encoder     (1,Dt)f32  (1,Dt)f32
    w1_ref, b1_ref,                       # lin              (dim,dim)bf16  (1,dim)f32
    w2_ref, b2_ref,                       # lin_final        (1,dim)f32     (1,1)f32
    o_ref,                                # output           (TM,1)f32
    x_scratch,                            # VMEM concat buf  (TM,dim)bf16
):
    c = z_src_ref.shape[1]
    dim = x_scratch.shape[1]

    # TimeEncoder: cos(t * Wt + bt).  K=1 contraction -> broadcast multiply on
    # the VPU, cos on the EUP.  Kept in f32 (v5e has no bf16 VPU/EUP).
    te = jnp.cos(t_ref[...] * tw_ref[...] + tb_ref[...])            # (TM, Dt) f32

    # Fused concat directly in VMEM (lane-range stores; no HBM round trip),
    # then a SINGLE K=dim MXU pass instead of three small-K passes.
    x_scratch[:, :c] = z_src_ref[...]
    x_scratch[:, c:2 * c] = z_dst_ref[...]
    x_scratch[:, 2 * c:dim] = te.astype(x_scratch.dtype)

    h = jnp.dot(x_scratch[...], w1_ref[...],
                preferred_element_type=jnp.float32)                 # (TM, dim) f32
    h = jnp.maximum(h + b1_ref[...], 0.0)                           # bias + ReLU

    # lin_final: width-1 output -> skip the MXU; VPU multiply + XLU lane reduce.
    o_ref[...] = jnp.sum(h * w2_ref[...], axis=-1, keepdims=True) + b2_ref[...]


def prepare_params(time_w, time_b, w1, b1, w2, b2, in_channels):
    """Done ONCE: convert PyTorch-layout weights into kernel layout/dtypes."""
    dt = time_w.shape[0]
    dim = 2 * in_channels + dt
    return dict(
        tw=jnp.reshape(time_w, (1, dt)).astype(jnp.float32),
        tb=jnp.reshape(time_b, (1, dt)).astype(jnp.float32),
        # (in, out) layout; column order matches concat([z_src, z_dst, te]).
        w1=jnp.transpose(w1).astype(jnp.bfloat16),                   # (dim, dim)
        b1=jnp.reshape(b1, (1, dim)).astype(jnp.float32),
        w2=jnp.reshape(w2, (1, dim)).astype(jnp.float32),            # row for VPU reduce
        b2=jnp.reshape(b2, (1, 1)).astype(jnp.float32),
    )


@functools.partial(jax.jit, static_argnames=("block_rows",))
def link_predictor(z_src, z_dst, t, params, *, block_rows=4096):
    n, c = z_src.shape
    dt = params["tw"].shape[1]
    dim = 2 * c + dt

    # bf16 activations for the GEMM (halves HBM traffic, native MXU rate);
    # timestamps stay f32 for the time encoder.
    z_src = z_src.astype(jnp.bfloat16)
    z_dst = z_dst.astype(jnp.bfloat16)
    t_col = jnp.reshape(t, (-1, 1)).astype(jnp.float32)

    # Row tile: large (amortizes ~0.35us/step, overlaps DMA), multiple of 8
    # (sublane constraint).  Clamp so the parallel grid has >= 2 steps when N
    # allows (feeds both TensorCores on v7x), and pad N to a tile multiple so
    # every step is a full tile.
    n8 = _round_up(max(n, 1), 8)
    tm = _round_up(min(block_rows, n8), 8)
    if n8 >= 16:
        tm = min(tm, _round_up(pl.cdiv(n8, 2), 8))
    n_pad = _round_up(n8, tm)
    if n_pad != n:
        pad = n_pad - n
        z_src = jnp.pad(z_src, ((0, pad), (0, 0)))
        z_dst = jnp.pad(z_dst, ((0, pad), (0, 0)))
        t_col = jnp.pad(t_col, ((0, pad), (0, 0)))

    grid = (n_pad // tm,)

    # Advisory cost model: one K=dim GEMM + bias/relu + VPU final reduce + time enc.
    flops = (2 * n_pad * dim * dim) + (2 * n_pad * dim) + (2 * n_pad * dim) + (3 * n_pad * dt)
    transcendentals = n_pad * dt
    bytes_accessed = (2 * 2 * n_pad * c            # z_src + z_dst (bf16)
                      + 4 * n_pad                  # t (f32)
                      + 4 * n_pad                  # out (f32)
                      + 2 * dim * dim              # w1 (bf16)
                      + 4 * (3 * dim + 2 * dt + 2))

    out = pl.pallas_call(
        link_predictor_kernel,
        out_shape=jax.ShapeDtypeStruct((n_pad, 1), jnp.float32),
        grid=grid,
        in_specs=[
            pl.BlockSpec((tm, c), lambda i: (i, 0)),      # z_src   (tiled over N)
            pl.BlockSpec((tm, c), lambda i: (i, 0)),      # z_dst
            pl.BlockSpec((tm, 1), lambda i: (i, 0)),      # t
            pl.BlockSpec((1, dt), lambda i: (0, 0)),      # time weight (pinned)
            pl.BlockSpec((1, dt), lambda i: (0, 0)),      # time bias   (pinned)
            pl.BlockSpec((dim, dim), lambda i: (0, 0)),   # w1 (single fused weight)
            pl.BlockSpec((1, dim), lambda i: (0, 0)),     # b1
            pl.BlockSpec((1, dim), lambda i: (0, 0)),     # w2 row (lin_final)
            pl.BlockSpec((1, 1), lambda i: (0, 0)),       # b2
        ],
        out_specs=pl.BlockSpec((tm, 1), lambda i: (i, 0)),
        scratch_shapes=[pltpu.VMEM((tm, dim), jnp.bfloat16)],   # concat buffer
        compiler_params=pltpu.CompilerParams(
            dimension_semantics=("parallel",),            # shard row tiles over TCs
            vmem_limit_bytes=32 * 1024 * 1024,            # headroom over v5e's 16MiB default
        ),
        cost_estimate=pl.CostEstimate(
            flops=flops,
            transcendentals=transcendentals,
            bytes_accessed=bytes_accessed,
        ),
    )(
        z_src, z_dst, t_col,
        params["tw"], params["tb"],
        params["w1"], params["b1"],
        params["w2"], params["b2"],
    )
    return out[:n]


def _reference(z_src, z_dst, t, time_w, time_b, w1, b1, w2, b2):
    hp = jax.lax.Precision.HIGHEST
    te = jnp.cos(jnp.reshape(t, (-1, 1)) @ time_w.T + time_b[None, :])
    x = jnp.concatenate([z_src, z_dst, te], axis=-1)
    h = jnp.maximum(jnp.dot(x, w1.T, precision=hp) + b1[None, :], 0.0)
    return jnp.dot(h, w2.T, precision=hp) + b2[None, :]


if __name__ == "__main__":
    key = jax.random.PRNGKey(0)
    ks = jax.random.split(key, 9)

    # Small shapes consistent with the module: 10 edges, in_channels=48,
    # time_dim=32 -> dim = 2*48 + 32 = 128 (lane-dense hidden).
    n, in_channels, time_dim = 10, 48, 32
    dim = 2 * in_channels + time_dim

    z_src = jax.random.normal(ks[0], (n, in_channels), dtype=jnp.float32)
    z_dst = jax.random.normal(ks[1], (n, in_channels), dtype=jnp.float32)
    t = jax.random.uniform(ks[2], (n,), dtype=jnp.float32) * 10.0

    time_w = jax.random.normal(ks[3], (time_dim, 1), dtype=jnp.float32)
    time_b = jax.random.normal(ks[4], (time_dim,), dtype=jnp.float32)
    w1 = jax.random.normal(ks[5], (dim, dim), dtype=jnp.float32) * 0.05
    b1 = jax.random.normal(ks[6], (dim,), dtype=jnp.float32) * 0.05
    w2 = jax.random.normal(ks[7], (1, dim), dtype=jnp.float32) * 0.05
    b2 = jax.random.normal(ks[8], (1,), dtype=jnp.float32) * 0.05

    params = prepare_params(time_w, time_b, w1, b1, w2, b2, in_channels)

    out = link_predictor(z_src, z_dst, t, params)
    out = jax.block_until_ready(out)

    ref = _reference(z_src, z_dst, t, time_w, time_b, w1, b1, w2, b2)
    assert out.shape == (n, 1), out.shape
    # GEMM runs in bf16 with f32 accumulation -> ~1e-2-level relative error
    # vs the f32 HIGHEST-precision reference is expected.
    assert jnp.allclose(out, ref, atol=2e-2, rtol=2e-2), "mismatch vs reference"

    print("KERNEL_OK")
</pallas_src>

<mosaic_0001>
module attributes {stable_mosaic.version = 11 : i64} {
  func.func @link_predictor_kernel(%arg0: i32, %arg1: memref<8x48xbf16, #tpu.memory_space<vmem>>, %arg2: memref<8x48xbf16, #tpu.memory_space<vmem>>, %arg3: memref<8x1xf32, #tpu.memory_space<vmem>>, %arg4: memref<1x32xf32, #tpu.memory_space<vmem>>, %arg5: memref<1x32xf32, #tpu.memory_space<vmem>>, %arg6: memref<128x128xbf16, #tpu.memory_space<vmem>>, %arg7: memref<1x128xf32, #tpu.memory_space<vmem>>, %arg8: memref<1x128xf32, #tpu.memory_space<vmem>>, %arg9: memref<1x1xf32, #tpu.memory_space<vmem>>, %arg10: memref<8x1xf32, #tpu.memory_space<vmem>>, %arg11: memref<8x128xbf16, #tpu.memory_space<vmem>>) attributes {dimension_semantics = [#tpu.dimension_semantics<parallel>], iteration_bounds = array<i64: 2>, scalar_prefetch = 0 : i64, scratch_operands = 1 : i64, tpu.core_type = #tpu.core_type<tc>, window_params = [{transform_indices = @transform_0, window_bounds = array<i64: 8, 48>}, {transform_indices = @transform_1, window_bounds = array<i64: 8, 48>}, {transform_indices = @transform_2, window_bounds = array<i64: 8, 1>}, {pipeline_mode = #tpu.pipeline_mode<synchronous>, transform_indices = @transform_3, window_bounds = array<i64: 1, 32>}, {pipeline_mode = #tpu.pipeline_mode<synchronous>, transform_indices = @transform_4, window_bounds = array<i64: 1, 32>}, {pipeline_mode = #tpu.pipeline_mode<synchronous>, transform_indices = @transform_5, window_bounds = array<i64: 128, 128>}, {pipeline_mode = #tpu.pipeline_mode<synchronous>, transform_indices = @transform_6, window_bounds = array<i64: 1, 128>}, {pipeline_mode = #tpu.pipeline_mode<synchronous>, transform_indices = @transform_7, window_bounds = array<i64: 1, 128>}, {pipeline_mode = #tpu.pipeline_mode<synchronous>, transform_indices = @transform_8, window_bounds = array<i64: 1, 1>}, {transform_indices = @transform_9, window_bounds = array<i64: 8, 1>}]} {
    %c0 = arith.constant 0 : index
    %c0_0 = arith.constant 0 : index
    %0 = vector.load %arg3[%c0, %c0_0] : memref<8x1xf32, #tpu.memory_space<vmem>>, vector<8x1xf32>
    %c0_1 = arith.constant 0 : index
    %c0_2 = arith.constant 0 : index
    %1 = vector.load %arg4[%c0_1, %c0_2] : memref<1x32xf32, #tpu.memory_space<vmem>>, vector<1x32xf32>
    %2 = vector.broadcast %0 : vector<8x1xf32> to vector<8x32xf32>
    %3 = vector.broadcast %1 : vector<1x32xf32> to vector<8x32xf32>
    %4 = arith.mulf %2, %3 : vector<8x32xf32>
    %c0_3 = arith.constant 0 : index
    %c0_4 = arith.constant 0 : index
    %5 = vector.load %arg5[%c0_3, %c0_4] : memref<1x32xf32, #tpu.memory_space<vmem>>, vector<1x32xf32>
    %6 = vector.broadcast %5 : vector<1x32xf32> to vector<8x32xf32>
    %7 = arith.addf %4, %6 : vector<8x32xf32>
    %8 = math.cos %7 : vector<8x32xf32>
    %c0_5 = arith.constant 0 : index
    %c0_6 = arith.constant 0 : index
    %9 = vector.load %arg1[%c0_5, %c0_6] : memref<8x48xbf16, #tpu.memory_space<vmem>>, vector<8x48xbf16>
    %c0_7 = arith.constant 0 : index
    %c0_8 = arith.constant 0 : index
    %10 = vector.load %arg11[%c0_7, %c0_8] : memref<8x128xbf16, #tpu.memory_space<vmem>>, vector<8x48xbf16>
    tpu.vector_store %arg11[%c0_7, %c0_8], %9 {strides = array<i32>} : memref<8x128xbf16, #tpu.memory_space<vmem>>, vector<8x48xbf16>,
    %c0_9 = arith.constant 0 : index
    %c0_10 = arith.constant 0 : index
    %11 = vector.load %arg2[%c0_9, %c0_10] : memref<8x48xbf16, #tpu.memory_space<vmem>>, vector<8x48xbf16>
    %c0_11 = arith.constant 0 : index
    %c48 = arith.constant 48 : index
    %12 = vector.load %arg11[%c0_11, %c48] : memref<8x128xbf16, #tpu.memory_space<vmem>>, vector<8x48xbf16>
    tpu.vector_store %arg11[%c0_11, %c48], %11 {strides = array<i32>} : memref<8x128xbf16, #tpu.memory_space<vmem>>, vector<8x48xbf16>,
    %13 = arith.truncf %8 : vector<8x32xf32> to vector<8x32xbf16>
    %c0_12 = arith.constant 0 : index
    %c96 = arith.constant 96 : index
    %14 = vector.load %arg11[%c0_12, %c96] : memref<8x128xbf16, #tpu.memory_space<vmem>>, vector<8x32xbf16>
    tpu.vector_store %arg11[%c0_12, %c96], %13 {strides = array<i32>} : memref<8x128xbf16, #tpu.memory_space<vmem>>, vector<8x32xbf16>,
    %c0_13 = arith.constant 0 : index
    %c0_14 = arith.constant 0 : index
    %15 = vector.load %arg11[%c0_13, %c0_14] : memref<8x128xbf16, #tpu.memory_space<vmem>>, vector<8x128xbf16>
    %c0_15 = arith.constant 0 : index
    %c0_16 = arith.constant 0 : index
    %16 = vector.load %arg6[%c0_15, %c0_16] : memref<128x128xbf16, #tpu.memory_space<vmem>>, vector<128x128xbf16>
    %cst = arith.constant dense<0.000000e+00> : vector<8x128xf32>
    %17 = tpu.matmul %15, %16, %cst {dimension_numbers = #tpu.dot_dimension_numbers<[1], [0], [0], [1], [0, 0, 1, 1], [], []>} : vector<8x128xbf16>, vector<128x128xbf16>, vector<8x128xf32> -> vector<8x128xf32>
    %c0_17 = arith.constant 0 : index
    %c0_18 = arith.constant 0 : index
    %18 = vector.load %arg7[%c0_17, %c0_18] : memref<1x128xf32, #tpu.memory_space<vmem>>, vector<1x128xf32>
    %19 = vector.broadcast %18 : vector<1x128xf32> to vector<8x128xf32>
    %20 = arith.addf %17, %19 : vector<8x128xf32>
    %cst_19 = arith.constant 0.000000e+00 : f32
    %21 = vector.broadcast %cst_19 : f32 to vector<8x128xf32>
    %22 = arith.maximumf %20, %21 : vector<8x128xf32>
    %c0_20 = arith.constant 0 : index
    %c0_21 = arith.constant 0 : index
    %23 = vector.load %arg8[%c0_20, %c0_21] : memref<1x128xf32, #tpu.memory_space<vmem>>, vector<1x128xf32>
    %24 = vector.broadcast %23 : vector<1x128xf32> to vector<8x128xf32>
    %25 = arith.mulf %22, %24 : vector<8x128xf32>
    %cst_22 = arith.constant dense<0.000000e+00> : vector<8xf32>
    %26 = vector.multi_reduction <add>, %25, %cst_22 [1] : vector<8x128xf32> to vector<8xf32>
    %27 = vector.shape_cast %26 : vector<8xf32> to vector<8x1xf32>
    %c0_23 = arith.constant 0 : index
    %c0_24 = arith.constant 0 : index
    %28 = vector.load %arg9[%c0_23, %c0_24] : memref<1x1xf32, #tpu.memory_space<vmem>>, vector<1x1xf32>
    %29 = vector.broadcast %28 : vector<1x1xf32> to vector<8x1xf32>
    %30 = arith.addf %27, %29 : vector<8x1xf32>
    %c0_25 = arith.constant 0 : index
    %c0_26 = arith.constant 0 : index
    %31 = vector.load %arg10[%c0_25, %c0_26] : memref<8x1xf32, #tpu.memory_space<vmem>>, vector<8x1xf32>
    tpu.vector_store %arg10[%c0_25, %c0_26], %30 {strides = array<i32>} : memref<8x1xf32, #tpu.memory_space<vmem>>, vector<8x1xf32>,
    return
  }
  func.func @transform_0(%arg0: i32) -> (i32, i32) {
    %c0_i32 = arith.constant 0 : i32
    %c0_i32_0 = arith.constant 0 : i32
    return %arg0, %c0_i32 : i32, i32
  }
  func.func @transform_1(%arg0: i32) -> (i32, i32) {
    %c0_i32 = arith.constant 0 : i32
    %c0_i32_0 = arith.constant 0 : i32
    return %arg0, %c0_i32 : i32, i32
  }
  func.func @transform_2(%arg0: i32) -> (i32, i32) {
    %c0_i32 = arith.constant 0 : i32
    %c0_i32_0 = arith.constant 0 : i32
    return %arg0, %c0_i32 : i32, i32
  }
  func.func @transform_3(%arg0: i32) -> (i32, i32) {
    %c0_i32 = arith.constant 0 : i32
    %c0_i32_0 = arith.constant 0 : i32
    %c0_i32_1 = arith.constant 0 : i32
    return %c0_i32, %c0_i32_0 : i32, i32
  }
  func.func @transform_4(%arg0: i32) -> (i32, i32) {
    %c0_i32 = arith.constant 0 : i32
    %c0_i32_0 = arith.constant 0 : i32
    %c0_i32_1 = arith.constant 0 : i32
    return %c0_i32, %c0_i32_0 : i32, i32
  }
  func.func @transform_5(%arg0: i32) -> (i32, i32) {
    %c0_i32 = arith.constant 0 : i32
    %c0_i32_0 = arith.constant 0 : i32
    %c0_i32_1 = arith.constant 0 : i32
    return %c0_i32, %c0_i32_0 : i32, i32
  }
  func.func @transform_6(%arg0: i32) -> (i32, i32) {
    %c0_i32 = arith.constant 0 : i32
    %c0_i32_0 = arith.constant 0 : i32
    %c0_i32_1 = arith.constant 0 : i32
    return %c0_i32, %c0_i32_0 : i32, i32
  }
  func.func @transform_7(%arg0: i32) -> (i32, i32) {
    %c0_i32 = arith.constant 0 : i32
    %c0_i32_0 = arith.constant 0 : i32
    %c0_i32_1 = arith.constant 0 : i32
    return %c0_i32, %c0_i32_0 : i32, i32
  }
  func.func @transform_8(%arg0: i32) -> (i32, i32) {
    %c0_i32 = arith.constant 0 : i32
    %c0_i32_0 = arith.constant 0 : i32
    %c0_i32_1 = arith.constant 0 : i32
    return %c0_i32, %c0_i32_0 : i32, i32
  }
  func.func @transform_9(%arg0: i32) -> (i32, i32) {
    %c0_i32 = arith.constant 0 : i32
    %c0_i32_0 = arith.constant 0 : i32
    return %arg0, %c0_i32 : i32, i32
  }
}

</mosaic_0001>

<llo_original>
// kernel: link_predictor.1
$region0: #{link_predictor.1}
  #allocation0 [shape = 'u32[]', space=smem, size = 0x4, offset = 0x4, fixed_abs, tag = 'smem constant byte address 0x4 - core index']
  #allocation1 [shape = 'u32[144,128]{1,0:T(1,128)}', space=vmem, size = 0x12000, scoped, tag = 'internal scratch']
  #allocation2 [shape = 'bf16[8,128]{1,0:T(8,128)(2,1)}', space=vmem, size = 0x800, scoped, tag = 'scratch operand']
  #allocation3 [shape = 'f32[1,1]{1,0:T(1,128)S(1)}', space=vmem, size = 0x200, scoped, tag = 'scoped memory for link_predictor.1']
  %s0 = inlined_call_operand.vmem [shape: bf16[16,48], index: 0, kind: input, shape index: {}]
  %s1 = inlined_call_operand.vmem [shape: bf16[16,48], index: 1, kind: input, shape index: {}]
  %s2 = inlined_call_operand.vmem [shape: f32[16,1], index: 2, kind: input, shape index: {}]
  %s3 = inlined_call_operand.vmem [shape: f32[1,32], index: 3, kind: input, shape index: {}]
  %s4 = inlined_call_operand.vmem [shape: f32[1,32], index: 4, kind: input, shape index: {}]
  %s5 = inlined_call_operand.vmem [shape: bf16[128,128], index: 5, kind: input, shape index: {}]
  %s6 = inlined_call_operand.vmem [shape: f32[1,128], index: 6, kind: input, shape index: {}]
  %s7 = inlined_call_operand.vmem [shape: f32[1,128], index: 7, kind: input, shape index: {}]
  %s8 = inlined_call_operand.<no memory space> [shape: f32[1,1], index: 8, kind: input, shape index: {}]
  %s9 = inlined_call_operand.vmem [shape: f32[16,1], index: 9, kind: output, shape index: {}]
  %s10 = sld [smem:[#allocation0]]
  $region69: #{link_predictor.1} parent=0
    _
  %s12 = ssub.s32 1, %s10
  %s13 = scalar_select 0, %s12, %s10
  %v14 = vstv %s8
  %15 = vst [vmem:[#allocation3] sm:$0x1] %v14
  loop: start=0, step=1, limit=4
  $region2: #{link_predictor.1} parent=0 // loop_pre_header
    _
  $region3: #{link_predictor.1} parent=0 // loop_header
    %s17 = sphi 0, %s21
    %p18 = scmp.ge.s32.totalorder %s17, 4
    %s27 = sphi 0, %s29
    %s30 = sphi 0, %s27
    %s31 = sphi 0, %s30
    %s47 = sphi 0, %s31
    %s53 = sphi 0, %s55
    %s56 = sphi 0, %s53
    %s57 = sphi 0, %s56
    %s73 = sphi 0, %s57
    %s79 = sphi 0, %s81
    %s82 = sphi 0, %s79
    %s83 = sphi 0, %s82
    %s99 = sphi 0, %s83
    %s103 = sphi 0, %s103
    %s105 = sphi 0, %s103
    %s106 = sphi 0, %s105
    %s120 = sphi 0, %s106
    %s124 = sphi 0, %s124
    %s126 = sphi 0, %s124
    %s127 = sphi 0, %s126
    %s141 = sphi 0, %s127
    %s145 = sphi 0, %s145
    %s147 = sphi 0, %s145
    %s148 = sphi 0, %s147
    %s162 = sphi 0, %s148
    %s166 = sphi 0, %s166
    %s168 = sphi 0, %s166
    %s169 = sphi 0, %s168
    %s183 = sphi 0, %s169
    %s187 = sphi 0, %s187
    %s189 = sphi 0, %s187
    %s190 = sphi 0, %s189
    %s204 = sphi 0, %s190
    %s208 = sphi 0, %s208
    %s210 = sphi 0, %s208
    %s211 = sphi 0, %s210
    %s225 = sphi 0, %s211
    %s231 = sphi 0, %s233
    %s234 = sphi 0, %s231
    %s235 = sphi 0, %s234
    %s251 = sphi 0, %s235
  $region4: #{link_predictor.1} parent=0 // loop_header_branch
    %20 = sbr.rel (%p18) target = $region8
  $region5: #{link_predictor.1} parent=0 // loop_body
    %s22 = ssub.s32 %s17, 1
    %s23 = ssub.s32 %s17, 2
    %s24 = sadd.s32 %s17, 1
    %s25 = ssub.s32 %s17, %s24
    %p26 = scmp.eq.s32.totalorder %s25, 0
    %s28 = sadd.s32 %s27, 1
    %s29 = scalar_select %p26, %s27, %s28
    %p32 = pneg %p26
    %p33 = scmp.eq.s32.totalorder %s17, 1
    %p34 = por %p32, %p33
    %p35 = scmp.ne.s32.totalorder %s27, %s30
    %p36 = scmp.eq.s32.totalorder %s17, 0
    %p37 = por %p35, %p36
    %p38 = scmp.ne.s32.totalorder %s27, %s30
    %p39 = scmp.eq.s32.totalorder %s22, 1
    %p40 = por %p38, %p39
    %p41 = scmp.ne.s32.totalorder %s30, %s31
    %p42 = scmp.eq.s32.totalorder %s22, 0
    %p43 = por %p41, %p42
    %p44 = scmp.ne.s32.totalorder %s30, %s31
    %p45 = scmp.eq.s32.totalorder %s23, 1
    %p46 = por %p44, %p45
    %p48 = scmp.ne.s32.totalorder %s31, %s47
    %p49 = scmp.eq.s32.totalorder %s23, 0
    %p50 = por %p48, %p49
    %s51 = ssub.s32 %s17, %s24
    %p52 = scmp.eq.s32.totalorder %s51, 0
    %s54 = sadd.s32 %s53, 1
    %s55 = scalar_select %p52, %s53, %s54
    %p58 = pneg %p52
    %p59 = scmp.eq.s32.totalorder %s17, 1
    %p60 = por %p58, %p59
    %p61 = scmp.ne.s32.totalorder %s53, %s56
    %p62 = scmp.eq.s32.totalorder %s17, 0
    %p63 = por %p61, %p62
    %p64 = scmp.ne.s32.totalorder %s53, %s56
    %p65 = scmp.eq.s32.totalorder %s22, 1
    %p66 = por %p64, %p65
    %p67 = scmp.ne.s32.totalorder %s56, %s57
    %p68 = scmp.eq.s32.totalorder %s22, 0
    %p69 = por %p67, %p68
    %p70 = scmp.ne.s32.totalorder %s56, %s57
    %p71 = scmp.eq.s32.totalorder %s23, 1
    %p72 = por %p70, %p71
    %p74 = scmp.ne.s32.totalorder %s57, %s73
    %p75 = scmp.eq.s32.totalorder %s23, 0
    %p76 = por %p74, %p75
    %s77 = ssub.s32 %s17, %s24
    %p78 = scmp.eq.s32.totalorder %s77, 0
    %s80 = sadd.s32 %s79, 1
    %s81 = scalar_select %p78, %s79, %s80
    %p84 = pneg %p78
    %p85 = scmp.eq.s32.totalorder %s17, 1
    %p86 = por %p84, %p85
    %p87 = scmp.ne.s32.totalorder %s79, %s82
    %p88 = scmp.eq.s32.totalorder %s17, 0
    %p89 = por %p87, %p88
    %p90 = scmp.ne.s32.totalorder %s79, %s82
    %p91 = scmp.eq.s32.totalorder %s22, 1
    %p92 = por %p90, %p91
    %p93 = scmp.ne.s32.totalorder %s82, %s83
    %p94 = scmp.eq.s32.totalorder %s22, 0
    %p95 = por %p93, %p94
    %p96 = scmp.ne.s32.totalorder %s82, %s83
    %p97 = scmp.eq.s32.totalorder %s23, 1
    %p98 = por %p96, %p97
    %p100 = scmp.ne.s32.totalorder %s83, %s99
    %p101 = scmp.eq.s32.totalorder %s23, 0
    %p102 = por %p100, %p101
    %s104 = sadd.s32 %s103, 1
    %p107 = scmp.eq.s32.totalorder %s17, 1
    %p108 = scmp.ne.s32.totalorder %s103, %s105
    %p109 = scmp.eq.s32.totalorder %s17, 0
    %p110 = por %p108, %p109
    %p111 = scmp.ne.s32.totalorder %s103, %s105
    %p112 = scmp.eq.s32.totalorder %s22, 1
    %p113 = por %p111, %p112
    %p114 = scmp.ne.s32.totalorder %s105, %s106
    %p115 = scmp.eq.s32.totalorder %s22, 0
    %p116 = por %p114, %p115
    %p117 = scmp.ne.s32.totalorder %s105, %s106
    %p118 = scmp.eq.s32.totalorder %s23, 1
    %p119 = por %p117, %p118
    %p121 = scmp.ne.s32.totalorder %s106, %s120
    %p122 = scmp.eq.s32.totalorder %s23, 0
    %p123 = por %p121, %p122
    %s125 = sadd.s32 %s124, 1
    %p128 = scmp.eq.s32.totalorder %s17, 1
    %p129 = scmp.ne.s32.totalorder %s124, %s126
    %p130 = scmp.eq.s32.totalorder %s17, 0
    %p131 = por %p129, %p130
    %p132 = scmp.ne.s32.totalorder %s124, %s126
    %p133 = scmp.eq.s32.totalorder %s22, 1
    %p134 = por %p132, %p133
    %p135 = scmp.ne.s32.totalorder %s126, %s127
    %p136 = scmp.eq.s32.totalorder %s22, 0
    %p137 = por %p135, %p136
    %p138 = scmp.ne.s32.totalorder %s126, %s127
    %p139 = scmp.eq.s32.totalorder %s23, 1
    %p140 = por %p138, %p139
    %p142 = scmp.ne.s32.totalorder %s127, %s141
    %p143 = scmp.eq.s32.totalorder %s23, 0
    %p144 = por %p142, %p143
    %s146 = sadd.s32 %s145, 1
    %p149 = scmp.eq.s32.totalorder %s17, 1
    %p150 = scmp.ne.s32.totalorder %s145, %s147
    %p151 = scmp.eq.s32.totalorder %s17, 0
    %p152 = por %p150, %p151
    %p153 = scmp.ne.s32.totalorder %s145, %s147
    %p154 = scmp.eq.s32.totalorder %s22, 1
    %p155 = por %p153, %p154
    %p156 = scmp.ne.s32.totalorder %s147, %s148
    %p157 = scmp.eq.s32.totalorder %s22, 0
    %p158 = por %p156, %p157
    %p159 = scmp.ne.s32.totalorder %s147, %s148
    %p160 = scmp.eq.s32.totalorder %s23, 1
    %p161 = por %p159, %p160
    %p163 = scmp.ne.s32.totalorder %s148, %s162
    %p164 = scmp.eq.s32.totalorder %s23, 0
    %p165 = por %p163, %p164
    %s167 = sadd.s32 %s166, 1
    %p170 = scmp.eq.s32.totalorder %s17, 1
    %p171 = scmp.ne.s32.totalorder %s166, %s168
    %p172 = scmp.eq.s32.totalorder %s17, 0
    %p173 = por %p171, %p172
    %p174 = scmp.ne.s32.totalorder %s166, %s168
    %p175 = scmp.eq.s32.totalorder %s22, 1
    %p176 = por %p174, %p175
    %p177 = scmp.ne.s32.totalorder %s168, %s169
    %p178 = scmp.eq.s32.totalorder %s22, 0
    %p179 = por %p177, %p178
    %p180 = scmp.ne.s32.totalorder %s168, %s169
    %p181 = scmp.eq.s32.totalorder %s23, 1
    %p182 = por %p180, %p181
    %p184 = scmp.ne.s32.totalorder %s169, %s183
    %p185 = scmp.eq.s32.totalorder %s23, 0
    %p186 = por %p184, %p185
    %s188 = sadd.s32 %s187, 1
    %p191 = scmp.eq.s32.totalorder %s17, 1
    %p192 = scmp.ne.s32.totalorder %s187, %s189
    %p193 = scmp.eq.s32.totalorder %s17, 0
    %p194 = por %p192, %p193
    %p195 = scmp.ne.s32.totalorder %s187, %s189
    %p196 = scmp.eq.s32.totalorder %s22, 1
    %p197 = por %p195, %p196
    %p198 = scmp.ne.s32.totalorder %s189, %s190
    %p199 = scmp.eq.s32.totalorder %s22, 0
    %p200 = por %p198, %p199
    %p201 = scmp.ne.s32.totalorder %s189, %s190
    %p202 = scmp.eq.s32.totalorder %s23, 1
    %p203 = por %p201, %p202
    %p205 = scmp.ne.s32.totalorder %s190, %s204
    %p206 = scmp.eq.s32.totalorder %s23, 0
    %p207 = por %p205, %p206
    %s209 = sadd.s32 %s208, 1
    %p212 = scmp.eq.s32.totalorder %s17, 1
    %p213 = scmp.ne.s32.totalorder %s208, %s210
    %p214 = scmp.eq.s32.totalorder %s17, 0
    %p215 = por %p213, %p214
    %p216 = scmp.ne.s32.totalorder %s208, %s210
    %p217 = scmp.eq.s32.totalorder %s22, 1
    %p218 = por %p216, %p217
    %p219 = scmp.ne.s32.totalorder %s210, %s211
    %p220 = scmp.eq.s32.totalorder %s22, 0
    %p221 = por %p219, %p220
    %p222 = scmp.ne.s32.totalorder %s210, %s211
    %p223 = scmp.eq.s32.totalorder %s23, 1
    %p224 = por %p222, %p223
    %p226 = scmp.ne.s32.totalorder %s211, %s225
    %p227 = scmp.eq.s32.totalorder %s23, 0
    %p228 = por %p226, %p227
    %s229 = ssub.s32 %s17, %s24
    %p230 = scmp.eq.s32.totalorder %s229, 0
    %s232 = sadd.s32 %s231, 1
    %s233 = scalar_select %p230, %s231, %s232
    %p236 = pneg %p230
    %p237 = scmp.eq.s32.totalorder %s17, 1
    %p238 = por %p236, %p237
    %p239 = scmp.ne.s32.totalorder %s231, %s234
    %p240 = scmp.eq.s32.totalorder %s17, 0
    %p241 = por %p239, %p240
    %p242 = scmp.ne.s32.totalorder %s231, %s234
    %p243 = scmp.eq.s32.totalorder %s22, 1
    %p244 = por %p242, %p243
    %p245 = scmp.ne.s32.totalorder %s234, %s235
    %p246 = scmp.eq.s32.totalorder %s22, 0
    %p247 = por %p245, %p246
    %p248 = scmp.ne.s32.totalorder %s234, %s235
    %p249 = scmp.eq.s32.totalorder %s23, 1
    %p250 = por %p248, %p249
    %p252 = scmp.ne.s32.totalorder %s235, %s251
    %p253 = scmp.eq.s32.totalorder %s23, 0
    %p254 = por %p252, %p253
    %p255 = scmp.le.s32.totalorder 1, %s17
    %p256 = scmp.lt.s32.totalorder %s17, 3
    %p257 = pnand %p255, %p256
    %p258 = pneg %p257
    // Predicated region
    $region9: #{link_predictor.1} parent=5 // pred_check
      _
    $region10: #{link_predictor.1} parent=5 // pred_check_branch
      %260 = sbr.rel (%p257) target = $region12
    $region11: #{link_predictor.1} parent=5 // pred_region
      %s261 = ssub.s32 %s17, 1
      // Predicated region
      $region13: #{link_predictor.1} parent=11 // pred_check
        %p262 = pneg %p116
      $region14: #{link_predictor.1} parent=11 // pred_check_branch
        %264 = sbr.rel (%p262) target = $region16
      $region15: #{link_predictor.1} parent=11 // pred_region
        _
      $region16: #{link_predictor.1} parent=11 // pred_fallthru
        _
      // Predicated region
      $region17: #{link_predictor.1} parent=11 // pred_check
        %p265 = pneg %p137
      $region18: #{link_predictor.1} parent=11 // pred_check_branch
        %267 = sbr.rel (%p265) target = $region20
      $region19: #{link_predictor.1} parent=11 // pred_region
        _
      $region20: #{link_predictor.1} parent=11 // pred_fallthru
        _
      // Predicated region
      $region21: #{link_predictor.1} parent=11 // pred_check
        %p268 = pneg %p158
      $region22: #{link_predictor.1} parent=11 // pred_check_branch
        %270 = sbr.rel (%p268) target = $region24
      $region23: #{link_predictor.1} parent=11 // pred_region
        _
      $region24: #{link_predictor.1} parent=11 // pred_fallthru
        _
      // Predicated region
      $region25: #{link_predictor.1} parent=11 // pred_check
        %p271 = pneg %p179
      $region26: #{link_predictor.1} parent=11 // pred_check_branch
        %273 = sbr.rel (%p271) target = $region28
      $region27: #{link_predictor.1} parent=11 // pred_region
        _
      $region28: #{link_predictor.1} parent=11 // pred_fallthru
        _
      // Predicated region
      $region29: #{link_predictor.1} parent=11 // pred_check
        %p274 = pneg %p200
      $region30: #{link_predictor.1} parent=11 // pred_check_branch
        %276 = sbr.rel (%p274) target = $region32
      $region31: #{link_predictor.1} parent=11 // pred_region
        _
      $region32: #{link_predictor.1} parent=11 // pred_fallthru
        _
      // Predicated region
      $region33: #{link_predictor.1} parent=11 // pred_check
        %p277 = pneg %p221
      $region34: #{link_predictor.1} parent=11 // pred_check_branch
        %279 = sbr.rel (%p277) target = $region36
      $region35: #{link_predictor.1} parent=11 // pred_region
        _
      $region36: #{link_predictor.1} parent=11 // pred_fallthru
        _
    $region12: #{link_predictor.1} parent=5 // pred_fallthru
      _
    %p280 = scmp.lt.s32.totalorder %s17, 2
    // Predicated region
    $region37: #{link_predictor.1} parent=5 // pred_check
      %p281 = pneg %p280
    $region38: #{link_predictor.1} parent=5 // pred_check_branch
      %283 = sbr.rel (%p281) target = $region40
    $region39: #{link_predictor.1} parent=5 // pred_region
      // Predicated region
      $region41: #{link_predictor.1} parent=39 // pred_check
        %p284 = pneg %p37
      $region42: #{link_predictor.1} parent=39 // pred_check_branch
        %286 = sbr.rel (%p284) target = $region44
      $region43: #{link_predictor.1} parent=39 // pred_region
        %p287 = scmp.lt.s32.totalorder %s17, 1
        %s288 = scalar_select %p287, %s17, 1
        %s289 = smul.addr %s288, 4
        %s290 = scalar_lea.vmem %s0, %s289
      $region44: #{link_predictor.1} parent=39 // pred_fallthru
        _
      // Predicated region
      $region45: #{link_predictor.1} parent=39 // pred_check
        %p291 = pneg %p63
      $region46: #{link_predictor.1} parent=39 // pred_check_branch
        %293 = sbr.rel (%p291) target = $region48
      $region47: #{link_predictor.1} parent=39 // pred_region
        %p294 = scmp.lt.s32.totalorder %s17, 1
        %s295 = scalar_select %p294, %s17, 1
        %s296 = smul.addr %s295, 4
        %s297 = scalar_lea.vmem %s1, %s296
      $region48: #{link_predictor.1} parent=39 // pred_fallthru
        _
      // Predicated region
      $region49: #{link_predictor.1} parent=39 // pred_check
        %p298 = pneg %p89
      $region50: #{link_predictor.1} parent=39 // pred_check_branch
        %300 = sbr.rel (%p298) target = $region52
      $region51: #{link_predictor.1} parent=39 // pred_region
        %p301 = scmp.lt.s32.totalorder %s17, 1
        %s302 = scalar_select %p301, %s17, 1
        %s303 = smul.addr %s302, 8
        %s304 = scalar_lea.vmem %s2, %s303
      $region52: #{link_predictor.1} parent=39 // pred_fallthru
        _
    $region40: #{link_predictor.1} parent=5 // pred_fallthru
      _
    %p305 = scmp.le.s32.totalorder 1, %s17
    %p306 = scmp.lt.s32.totalorder %s17, 3
    %p307 = pnand %p305, %p306
    %p308 = pneg %p307
    // Predicated region
    $region53: #{link_predictor.1} parent=5 // pred_check
      _
    $region54: #{link_predictor.1} parent=5 // pred_check_branch
      %310 = sbr.rel (%p307) target = $region56
    $region55: #{link_predictor.1} parent=5 // pred_region
      %s311 = ssub.s32 %s17, 1
      %p312 = scmp.lt.s32.totalorder %s22, 1
      %s313 = scalar_select %p312, %s22, 1
      %s314 = smul.addr %s313, 4
      %s315 = scalar_lea.vmem %s0, %s314
      %p316 = pneg %p43
      %p317 = pneg %p40
      %p318 = scmp.lt.s32.totalorder %s22, 1
      %s319 = scalar_select %p318, %s22, 1
      %s320 = smul.addr %s319, 4
      %s321 = scalar_lea.vmem %s1, %s320
      %p322 = pneg %p69
      %p323 = pneg %p66
      %p324 = scmp.lt.s32.totalorder %s22, 1
      %s325 = scalar_select %p324, %s22, 1
      %s326 = smul.addr %s325, 8
      %s327 = scalar_lea.vmem %s2, %s326
      %p328 = pneg %p95
      %p329 = pneg %p92
      %p330 = pneg %p116
      %p331 = pneg %p113
      %p332 = pneg %p137
      %p333 = pneg %p134
      %p334 = pneg %p158
      %p335 = pneg %p155
      %p336 = pneg %p179
      %p337 = pneg %p176
      %p338 = pneg %p200
      %p339 = pneg %p197
      %p340 = pneg %p221
      %p341 = pneg %p218
      %p342 = pneg %p247
      %p343 = pneg %p244
      %p344 = scmp.lt.s32.totalorder %s22, 1
      %s345 = scalar_select %p344, %s22, 1
      %s346 = smul.addr %s345, 8
      %s347 = scalar_lea.vmem %s9, %s346
      %p348 = scmp.lt.s32.totalorder %s22, 1
      %s349 = scalar_select %p348, %s22, 1
      %s350 = smul.addr %s349, 4
      %s351 = scalar_lea.vmem %s0, %s350
      %p352 = scmp.lt.s32.totalorder %s22, 1
      %s353 = scalar_select %p352, %s22, 1
      %s354 = smul.addr %s353, 4
      %s355 = scalar_lea.vmem %s1, %s354
      %p356 = scmp.lt.s32.totalorder %s22, 1
      %s357 = scalar_select %p356, %s22, 1
      %s358 = smul.addr %s357, 8
      %s359 = scalar_lea.vmem %s2, %s358
      %p360 = scmp.lt.s32.totalorder %s22, 1
      %s361 = scalar_select %p360, %s22, 1
      %s362 = smul.addr %s361, 8
      %s363 = scalar_lea.vmem %s9, %s362
      %v365 = vld [vmem:[%s359] sm:$0xff]
      %v366 = vld [vmem:[%s3] sm:$0x1]
      %368 = vset.pattern.permute.xlu0 0
      %369 = vperm.xlu0 %368, %v365
      %v370 = vpop.permute.xlu0 %369
      %v373 = vlaneseq
      %v374 = vshrl.u32 %v373, 7
      %v375 = vsub.s32 0, %v374
      %v376 = vrot.slane %v366, %v375
      %v378 = vmul.f32 %v370, %v376
      %v379 = vld [vmem:[%s4] sm:$0x1]
      %v381 = vlaneseq
      %v382 = vshrl.u32 %v381, 7
      %v383 = vsub.s32 0, %v382
      %v384 = vrot.slane %v379, %v383
      %v386 = vadd.f32 %v378, %v384
      %v387 = vand.u32 2147483647, %v386
      %vm388 = vcmp.le.f32.partialorder %v387, 0.7853982
      %vm389 = vcmp.lt.s32.totalorder %v386, 0
      %v390 = vand.u32 %v386, 2139095040
      %v391 = vshrl.u32 %v390, 23
      %v392 = vsub.s32 %v391, 127
      %v393 = vand.u32 2147483647, %v386
      %v394 = vand.u32 %v393, 8388607
      %v395 = vor.u32 %v394, 8388608
      %v396 = vsub.s32 0, %v395
      %v397 = vadd.s32 %v392, 1
      %vm398 = vcmp.gt.s32.totalorder %v397, 0
      %v399 = vsel %vm398, %v397, 0
      %v400 = vshrl.u32 %v399, 5
      %v401 = vand.u32 %v399, 31
      %v402 = vsub.s32 32, %v401
      %v403 = vshrl.u32 683565275, %v402
      %v404 = vshll.u32 683565275, %v401
      %v405 = vshrl.u32 2475754826, %v402
      %v406 = vor.u32 %v404, %v405
      %v407 = vshll.u32 2475754826, %v401
      %v408 = vshrl.u32 2131351028, %v402
      %v409 = vor.u32 %v407, %v408
      %v410 = vshll.u32 2131351028, %v401
      %v411 = vshrl.u32 2102212464, %v402
      %v412 = vor.u32 %v410, %v411
      %v413 = vshll.u32 2102212464, %v401
      %v414 = vshrl.u32 920167782, %v402
      %v415 = vor.u32 %v413, %v414
      %v416 = vshll.u32 920167782, %v401
      %v417 = vshrl.u32 1326507024, %v402
      %v418 = vor.u32 %v416, %v417
      %vm419 = vcmp.lt.s32.totalorder %v400, 1
      %vm420 = vcmp.lt.s32.totalorder %v400, 2
      %vm421 = vcmp.lt.s32.totalorder %v400, 3
      %vm422 = vcmp.lt.s32.totalorder %v400, 4
      %v423 = vsel %vm419, %v403, %v406
      %v424 = vsel %vm422, %v412, 2102212464
      %v425 = vsel %vm421, %v409, %v424
      %v426 = vsel %vm420, %v423, %v425
      %v427 = vsel %vm419, %v406, %v409
      %v428 = vsel %vm422, %v415, 920167782
      %v429 = vsel %vm421, %v412, %v428
      %v430 = vsel %vm420, %v427, %v429
      %v431 = vsel %vm419, %v409, %v412
      %v432 = vsel %vm422, %v418, 1326507024
      %v433 = vsel %vm421, %v415, %v432
      %v434 = vsel %vm420, %v431, %v433
      %v435 = vshll.u32 %v395, 8
      %v436 = vmul.u32.u64.compose %v435, %v434
      %v437 = vextract.low.u32 %v436
      %v438 = vextract.high.u32 %v436
      %v439 = vmul.u32.u64.compose %v435, %v430
      %v440 = vextract.low.u32 %v439
      %v441 = vextract.high.u32 %v439
      %v442 = vmul.u32 %v435, %v426
      %v443 = vadd.s32 %v438, %v440
      %vm444 = vc.u32 %v438, %v440
      %v445 = vadd.s32 %v441, 1
      %v446 = vsel %vm444, %v445, %v441
      %v447 = vadd.s32 %v442, %v446
      %v448 = vadd.s32 %v447, 536870912
      %v449 = vshrl.u32 %v448, 30
      %v450 = vshll.u32 %v449, 30
      %v451 = vsub.s32 %v447, %v450
      %vm452 = vcmp.lt.s32.totalorder %v451, 0
      %v453 = vsub.s32 0, %v451
      %v454 = vsel %vm452, %v453, %v451
      %v455 = vclz %v454
      %v456 = vsub.s32 %v455, 2
      %vm457 = vcmp.gt.s32.totalorder 0, %v456
      %v458 = vsel %vm457, 0, %v456
      %v459 = vsub.s32 32, %v458
      %v460 = vshll.u32 %v451, %v458
      %v461 = vshrl.u32 %v443, %v459
      %v462 = vor.u32 %v460, %v461
      %v463 = vsub.s32 4294967266, %v458
      %v464 = vadd.s32 %v463, 127
      %v465 = vshll.u32 %v464, 23
      %v466 = vor.u32 4788187, %v465
      %v467 = vand.u32 2147483647, %v466
      %v469 = vcvt.s32.f32 %v462
      %v470 = vmul.f32 %v469, %v467
      %v471 = vxor.u32 %v470, 2147483648
      %v472 = vsel %vm389, %v471, %v470
      %v473 = vsub.s32 4, %v449
      %v474 = vsel %vm389, %v473, %v449
      %v475 = vsel %vm388, %v386, %v472
      %v476 = vsel %vm388, 0, %v474
      %v477 = vcosq.f32.pop %v475
      %v478 = vsinq.f32.pop %v475
      %vm479 = vweird.f32 %v386
      %v480 = vand.u32 %v476, 3
      %vm481 = vcmp.lt.s32.totalorder %v480, 2
      %vm482 = vcmp.eq.s32.totalorder %v480, 0
      %v483 = vxor.u32 %v478, 2147483648
      %v484 = vsel %vm482, %v477, %v483
      %vm485 = vcmp.eq.s32.totalorder %v480, 2
      %v486 = vxor.u32 %v477, 2147483648
      %v487 = vsel %vm485, %v486, %v478
      %v488 = vsel %vm481, %v484, %v487
      %v489 = vsel %vm479, nan, %v488
      %v490 = vld [vmem:[%s351] sm:$0xf]
      %vm491 = vcmask 388096
      %492 = vst.msk [vmem:[#allocation2] sm:$0xf] %vm491, %v490
      %v493 = vld [vmem:[%s355] sm:$0xf]
      %495 = vrot.lane.b32.xlu0 %v493, 48
      %v496 = vpop.permute.xlu0 %495
      %vm498 = vcmask 781696
      %499 = vst.msk [vmem:[#allocation2] sm:$0xf] %vm498, %v496
      %v500 = vpack.c.bf16 %v489, %v489
      %v502 = vunpack.c.l.b16 %v500
      %v503 = vpack.c.b16 %v502, %v502
      %504 = vrot.lane.b32.xlu0 %v503, 96
      %v505 = vpop.permute.xlu0 %504
      %vm507 = vcmask 1044224
      %508 = vst.msk [vmem:[#allocation2] sm:$0xf] %vm507, %v505
      %v509 = vld [vmem:[#allocation2] sm:$0xf]
      %v510 = vld [vmem:[%s5] sm:$0xf]
      %v511 = vld [vmem:[%s5 + $0x4] sm:$0xf]
      %v512 = vld [vmem:[%s5 + $0x8] sm:$0xf]
      %v513 = vld [vmem:[%s5 + $0xc] sm:$0xf]
      %v514 = vld [vmem:[%s5 + $0x10] sm:$0xf]
      %v515 = vld [vmem:[%s5 + $0x14] sm:$0xf]
      %v516 = vld [vmem:[%s5 + $0x18] sm:$0xf]
      %v517 = vld [vmem:[%s5 + $0x1c] sm:$0xf]
      %v518 = vld [vmem:[%s5 + $0x20] sm:$0xf]
      %v519 = vld [vmem:[%s5 + $0x24] sm:$0xf]
      %v520 = vld [vmem:[%s5 + $0x28] sm:$0xf]
      %v521 = vld [vmem:[%s5 + $0x2c] sm:$0xf]
      %v522 = vld [vmem:[%s5 + $0x30] sm:$0xf]
      %v523 = vld [vmem:[%s5 + $0x34] sm:$0xf]
      %v524 = vld [vmem:[%s5 + $0x38] sm:$0xf]
      %v525 = vld [vmem:[%s5 + $0x3c] sm:$0xf]
      %v526 = vld [vmem:[%s6] sm:$0x1]
      %v528 = vlaneseq
      %v529 = vshrl.u32 %v528, 7
      %v530 = vsub.s32 0, %v529
      %v531 = vrot.slane %v526, %v530
      %v549 = vunpack.c.l.b16 %v510
      %v550 = vunpack.c.l.b16 %v511
      %v551 = vunpack.c.l.b16 %v512
      %v552 = vunpack.c.l.b16 %v513
      %v553 = vunpack.c.l.b16 %v514
      %v554 = vunpack.c.l.b16 %v515
      %v555 = vunpack.c.l.b16 %v516
      %v556 = vunpack.c.l.b16 %v517
      %v557 = vunpack.c.l.b16 %v518
      %v558 = vunpack.c.l.b16 %v519
      %v559 = vunpack.c.l.b16 %v520
      %v560 = vunpack.c.l.b16 %v521
      %v561 = vunpack.c.l.b16 %v522
      %v562 = vunpack.c.l.b16 %v523
      %v563 = vunpack.c.l.b16 %v524
      %v564 = vunpack.c.l.b16 %v525
      %v565 = vpack.c.b16 %v550, %v549
      %v566 = vpack.c.b16 %v552, %v551
      %v567 = vpack.c.b16 %v554, %v553
      %v568 = vpack.c.b16 %v556, %v555
      %v569 = vpack.c.b16 %v558, %v557
      %v570 = vpack.c.b16 %v560, %v559
      %v571 = vpack.c.b16 %v562, %v561
      %v572 = vpack.c.b16 %v564, %v563
      %581 = vmatprep.subr.bf16.mxu0 0
      %582 = vmatpush1.bf16.msra.mxu0 %v572
      %583 = vmatprep.subr.bf16.mxu0 0
      %584 = vmatpush1.bf16.msra.mxu0 %v571
      %585 = vmatprep.subr.bf16.mxu0 0
      %586 = vmatpush1.bf16.msra.mxu0 %v570
      %587 = vmatprep.subr.bf16.mxu0 0
      %588 = vmatpush1.bf16.msra.mxu0 %v569
      %589 = vmatprep.subr.bf16.mxu0 0
      %590 = vmatpush1.bf16.msra.mxu0 %v568
      %591 = vmatprep.subr.bf16.mxu0 0
      %592 = vmatpush1.bf16.msra.mxu0 %v567
      %593 = vmatprep.subr.bf16.mxu0 0
      %594 = vmatpush1.bf16.msra.mxu0 %v566
      %595 = vmatprep.subr.bf16.mxu0 0
      %596 = vmatpush1.bf16.msra.mxu0 %v565
      %597 = vmatprep.subr.bf16.mxu0 0
      %598 = vmatpush2.bf16.msra.mxu0 0
      %599 = vmatprep.subr.bf16.mxu0 0
      %600 = vmatpush2.bf16.msra.mxu0 0
      %601 = vmatprep.subr.bf16.mxu0 0
      %602 = vmatpush2.bf16.msra.mxu0 0
      %603 = vmatprep.subr.bf16.mxu0 0
      %604 = vmatpush2.bf16.msra.mxu0 0
      %605 = vmatprep.subr.bf16.mxu0 0
      %606 = vmatpush2.bf16.msra.mxu0 0
      %607 = vmatprep.subr.bf16.mxu0 0
      %608 = vmatpush2.bf16.msra.mxu0 0
      %609 = vmatprep.subr.bf16.mxu0 0
      %610 = vmatpush2.bf16.msra.mxu0 0
      %611 = vmatprep.subr.bf16.mxu0 0
      %612 = vmatpush2.bf16.msra.mxu0 0
      %613 = vmatprep.mubr.bf16.mxu0 0
      %614 = vmatmul.mubr.bf16.gmra.mxu0 %v509
      %v615 = vpop.f32.mrf.mxu0
      %v616 = vadd.f32 %v531, %v615
      %v617 = vpop.f32.mrf.mxu0
      %v618 = vpop.f32.mrf.mxu0
      %v619 = vpop.f32.mrf.mxu0
      %620 = vdwg.mxu0
      %v621 = vmax.f32 %v616, 0.0
      %v622 = vld [vmem:[%s7] sm:$0x1]
      %v624 = vlaneseq
      %v625 = vshrl.u32 %v624, 7
      %v626 = vsub.s32 0, %v625
      %v627 = vrot.slane %v622, %v626
      %v629 = vmul.f32 %v621, %v627
      %630 = vadd.xlane.f32.xlu0 %v629
      %v631 = vpop.xlane.xlu0 %630
      %v632 = vld [vmem:[#allocation3] sm:$0x1]
      %v634 = vlaneseq
      %v635 = vshrl.u32 %v634, 7
      %v636 = vsub.s32 0, %v635
      %v637 = vrot.slane %v632, %v636
      %v639 = vadd.f32 %v631, %v637
      %vm640 = vcmask 7168
      %641 = vst.msk [vmem:[%s363] sm:$0xff] %vm640, %v639
      %p642 = scmp.lt.s32.totalorder %s22, 1
      %s643 = scalar_select %p642, %s22, 1
      %s644 = smul.addr %s643, 8
      %s645 = scalar_lea.vmem %s9, %s644
      // Predicated region
      $region57: #{link_predictor.1} parent=55 // pred_check
        %p646 = pneg %p244
      $region58: #{link_predictor.1} parent=55 // pred_check_branch
        %648 = sbr.rel (%p646) target = $region60
      $region59: #{link_predictor.1} parent=55 // pred_region
        _
      $region60: #{link_predictor.1} parent=55 // pred_fallthru
        _
    $region56: #{link_predictor.1} parent=5 // pred_fallthru
      _
    %p649 = scmp.le.s32.totalorder 2, %s17
    // Predicated region
    $region61: #{link_predictor.1} parent=5 // pred_check
      %p650 = pneg %p649
    $region62: #{link_predictor.1} parent=5 // pred_check_branch
      %652 = sbr.rel (%p650) target = $region64
    $region63: #{link_predictor.1} parent=5 // pred_region
      %s653 = ssub.s32 %s17, 2
      // Predicated region
      $region65: #{link_predictor.1} parent=63 // pred_check
        %p654 = pneg %p250
      $region66: #{link_predictor.1} parent=63 // pred_check_branch
        %656 = sbr.rel (%p654) target = $region68
      $region67: #{link_predictor.1} parent=63 // pred_region
        %p657 = scmp.lt.s32.totalorder %s23, 1
        %s658 = scalar_select %p657, %s23, 1
        %s659 = smul.addr %s658, 8
        %s660 = scalar_lea.vmem %s9, %s659
      $region68: #{link_predictor.1} parent=63 // pred_fallthru
        _
    $region64: #{link_predictor.1} parent=5 // pred_fallthru
      _
  $region6: #{link_predictor.1} parent=0 // loop_footer
    %s21 = sadd.s32 1, %s17
  $region7: #{link_predictor.1} parent=0 // loop_footer_branch
    %16 = sbr.rel target = $region3
  $region8: #{link_predictor.1} parent=0 // loop_exit
    _

</llo_original>
